<compile_context>
chip_gen: v6e
topology: v6e:2x2x1
jax: 0.10.0
libtpu: 0.0.40
codegen_flags: <defaults>
</compile_context>

<pallas_src>
import functools

import jax
import jax.numpy as jnp
from jax.experimental import pallas as pl
from jax.experimental.pallas import tpu as pltpu


# ---------------------------------------------------------------------------
# helpers
# ---------------------------------------------------------------------------
def _pick_tile(dim, preferred, align):
    """Largest multiple of `align` dividing `dim`, capped at `preferred`;
    falls back to the full dimension (always a legal block)."""
    t = min(preferred, dim)
    t -= t % align
    while t >= align:
        if dim % t == 0:
            return t
        t -= align
    return dim


def _row_align(dtype):
    # bf16 packs two rows per sublane -> prefer 16-row tiles (v5e note).
    return 16 if jnp.dtype(dtype).itemsize == 2 else 8


def _fused_head_group(n_head, d_k, d_v):
    """Smallest divisor h of n_head such that head-group blocks of the fused
    [q|k|v] slab are legal 128-lane BlockSpecs (q/k width, v width, v offset).
    None => the fused-slab routing is not expressible; use the split path."""
    hk2 = 2 * n_head * d_k
    for h in range(1, n_head + 1):
        if n_head % h:
            continue
        if (h * d_k) % 128 or (h * d_v) % 128:
            continue
        if hk2 % (h * d_v):
            continue
        return h
    return None


def _split_head_group(n_head, d_k, d_v):
    """Head-group size for separate q/k/v arrays (full width always legal)."""
    for h in range(1, n_head + 1):
        if n_head % h:
            continue
        if (h * d_k) % 128 == 0 and (h * d_v) % 128 == 0:
            return h
    return n_head


# ---------------------------------------------------------------------------
# Tiled linear:  out = x @ w + b   (w stored as (in, out))
# ---------------------------------------------------------------------------
def _linear_kernel_1k(x_ref, w_ref, b_ref, o_ref):
    # single K step: no accumulator scratch, no pl.when branches.
    o_ref[...] = (jnp.dot(x_ref[...], w_ref[...],
                          preferred_element_type=jnp.float32)
                  + b_ref[...]).astype(o_ref.dtype)


def _linear_kernel(x_ref, w_ref, b_ref, o_ref, acc_ref):
    k = pl.program_id(2)

    @pl.when(k == 0)
    def _():
        acc_ref[...] = jnp.zeros_like(acc_ref)

    acc_ref[...] += jnp.dot(x_ref[...], w_ref[...],
                            preferred_element_type=jnp.float32)

    @pl.when(k == pl.num_programs(2) - 1)
    def _():
        o_ref[...] = (acc_ref[...] + b_ref[...]).astype(o_ref.dtype)


def linear(x, w_t, b, *, tm=512, tn=512, tk=None):
    """x: (M, K), w_t: (K, N) (transposed torch weight), b: (1, N)."""
    M, K = x.shape
    N = w_t.shape[1]
    tm = _pick_tile(M, tm, _row_align(x.dtype))
    tn = _pick_tile(N, tn, 128)
    tk = (K if K <= 1024 else _pick_tile(K, 512, 128)) if tk is None \
        else _pick_tile(K, tk, 128)

    if tk == K:
        return pl.pallas_call(
            _linear_kernel_1k,
            grid=(M // tm, N // tn),
            in_specs=[
                pl.BlockSpec((tm, K), lambda i, j: (i, 0)),
                pl.BlockSpec((K, tn), lambda i, j: (0, j)),
                pl.BlockSpec((1, tn), lambda i, j: (0, j)),
            ],
            out_specs=pl.BlockSpec((tm, tn), lambda i, j: (i, j)),
            out_shape=jax.ShapeDtypeStruct((M, N), x.dtype),
            compiler_params=pltpu.CompilerParams(
                dimension_semantics=("parallel", "parallel")),
        )(x, w_t, b)

    return pl.pallas_call(
        _linear_kernel,
        grid=(M // tm, N // tn, K // tk),
        in_specs=[
            pl.BlockSpec((tm, tk), lambda i, j, kk: (i, kk)),
            pl.BlockSpec((tk, tn), lambda i, j, kk: (kk, j)),
            pl.BlockSpec((1, tn), lambda i, j, kk: (0, j)),
        ],
        out_specs=pl.BlockSpec((tm, tn), lambda i, j, kk: (i, j)),
        out_shape=jax.ShapeDtypeStruct((M, N), x.dtype),
        scratch_shapes=[pltpu.VMEM((tm, tn), jnp.float32)],
        compiler_params=pltpu.CompilerParams(
            dimension_semantics=("parallel", "parallel", "arbitrary")),
    )(x, w_t, b)


# ---------------------------------------------------------------------------
# Fused fc projection + residual add + LayerNorm (biased variance, torch-style)
# ---------------------------------------------------------------------------
def _fc_ln_epilogue(y, g, bb, eps, out_dtype):
    mu = jnp.mean(y, axis=-1, keepdims=True)
    var = jnp.mean(jnp.square(y - mu), axis=-1, keepdims=True)
    return ((y - mu) * jax.lax.rsqrt(var + eps) * g + bb).astype(out_dtype)


def _fc_ln_kernel_1k(x_ref, w_ref, b_ref, r_ref, g_ref, bb_ref, o_ref, *, eps):
    y = jnp.dot(x_ref[...], w_ref[...], preferred_element_type=jnp.float32)
    y = y + b_ref[...] + r_ref[...].astype(jnp.float32)
    o_ref[...] = _fc_ln_epilogue(y, g_ref[...], bb_ref[...], eps, o_ref.dtype)


def _fc_ln_kernel(x_ref, w_ref, b_ref, r_ref, g_ref, bb_ref, o_ref, acc_ref,
                  *, eps):
    k = pl.program_id(1)

    @pl.when(k == 0)
    def _():
        acc_ref[...] = jnp.zeros_like(acc_ref)

    acc_ref[...] += jnp.dot(x_ref[...], w_ref[...],
                            preferred_element_type=jnp.float32)

    @pl.when(k == pl.num_programs(1) - 1)
    def _():
        y = acc_ref[...] + b_ref[...] + r_ref[...].astype(jnp.float32)
        o_ref[...] = _fc_ln_epilogue(y, g_ref[...], bb_ref[...], eps,
                                     o_ref.dtype)


def fc_add_layernorm(ctx, w_fc, b_fc, residual, gamma, beta, *, eps=1e-5,
                     tm=512, tk=None):
    """LayerNorm(ctx @ w_fc + b_fc + residual) in one pallas_call."""
    M, K = ctx.shape
    D = w_fc.shape[1]
    tm = _pick_tile(M, tm, _row_align(ctx.dtype))
    tk = (K if K <= 1024 else _pick_tile(K, 512, 128)) if tk is None \
        else _pick_tile(K, tk, 128)

    if tk == K:
        return pl.pallas_call(
            functools.partial(_fc_ln_kernel_1k, eps=eps),
            grid=(M // tm,),
            in_specs=[
                pl.BlockSpec((tm, K), lambda i: (i, 0)),
                pl.BlockSpec((K, D), lambda i: (0, 0)),
                pl.BlockSpec((1, D), lambda i: (0, 0)),
                pl.BlockSpec((tm, D), lambda i: (i, 0)),
                pl.BlockSpec((1, D), lambda i: (0, 0)),
                pl.BlockSpec((1, D), lambda i: (0, 0)),
            ],
            out_specs=pl.BlockSpec((tm, D), lambda i: (i, 0)),
            out_shape=jax.ShapeDtypeStruct((M, D), residual.dtype),
            compiler_params=pltpu.CompilerParams(
                dimension_semantics=("parallel",)),
        )(ctx, w_fc, b_fc, residual, gamma, beta)

    return pl.pallas_call(
        functools.partial(_fc_ln_kernel, eps=eps),
        grid=(M // tm, K // tk),
        in_specs=[
            pl.BlockSpec((tm, tk), lambda i, k: (i, k)),
            pl.BlockSpec((tk, D), lambda i, k: (k, 0)),
            pl.BlockSpec((1, D), lambda i, k: (0, 0)),
            pl.BlockSpec((tm, D), lambda i, k: (i, 0)),
            pl.BlockSpec((1, D), lambda i, k: (0, 0)),
            pl.BlockSpec((1, D), lambda i, k: (0, 0)),
        ],
        out_specs=pl.BlockSpec((tm, D), lambda i, k: (i, 0)),
        out_shape=jax.ShapeDtypeStruct((M, D), residual.dtype),
        scratch_shapes=[pltpu.VMEM((tm, D), jnp.float32)],
        compiler_params=pltpu.CompilerParams(
            dimension_semantics=("parallel", "arbitrary")),
    )(ctx, w_fc, b_fc, residual, gamma, beta)


# ---------------------------------------------------------------------------
# Flash-style scaled dot-product attention
#   grid = (batch, head_group, kv_tile); online softmax over the KV axis.
# ---------------------------------------------------------------------------
def _flash_attn_kernel(q_ref, k_ref, v_ref, mask_ref, *rest,
                       hg, d_k, d_v, out_probs):
    if out_probs:
        o_ref, a_ref, m_sc, l_sc, acc_sc = rest
    else:
        o_ref, m_sc, l_sc, acc_sc = rest
        a_ref = None

    t = pl.program_id(2)

    @pl.when(t == 0)
    def _():
        m_sc[...] = jnp.full_like(m_sc, -jnp.inf)
        l_sc[...] = jnp.zeros_like(l_sc)
        acc_sc[...] = jnp.zeros_like(acc_sc)

    # Additive mask penalty, shared by every head in the group (0 / -1e9).
    neg = mask_ref[0].astype(jnp.float32) * jnp.float32(-1e9)   # (mrows, Tk)

    for h in range(hg):
        # ref slices (no full-slab load); heads within a 128-lane-aligned group.
        q_h = q_ref[0, :, h * d_k:(h + 1) * d_k]                # (Lq, d_k)
        k_h = k_ref[0, :, h * d_k:(h + 1) * d_k]                # (Tk, d_k)
        v_h = v_ref[0, :, h * d_v:(h + 1) * d_v]                # (Tk, d_v)

        # q @ k^T on the MXU (contract last dims of both; no explicit transpose).
        s = jax.lax.dot_general(q_h, k_h, (((1,), (1,)), ((), ())),
                                preferred_element_type=jnp.float32)
        s = s + neg                                             # (Lq, Tk)

        m_prev = m_sc[h]                                        # (Lq, 1)
        m_new = jnp.maximum(m_prev, jnp.max(s, axis=-1, keepdims=True))
        alpha = jnp.exp(m_prev - m_new)
        e = jnp.exp(s - m_new)                                  # (Lq, Tk)
        l_new = alpha * l_sc[h] + jnp.sum(e, axis=-1, keepdims=True)
        pv = jnp.dot(e.astype(v_h.dtype), v_h,
                     preferred_element_type=jnp.float32)        # (Lq, d_v)
        acc_sc[h] = alpha * acc_sc[h] + pv
        m_sc[h] = m_new
        l_sc[h] = l_new

        if a_ref is not None:
            # Only emitted on the single-KV-tile path (wrapper forces T == 1),
            # so l_new is final; exact divide for test-grade row sums.
            a_ref[h, 0] = (e / l_new).astype(a_ref.dtype)

    @pl.when(t == pl.num_programs(2) - 1)
    def _():
        parts = [acc_sc[h] * pl.reciprocal(l_sc[h], approx=True)
                 for h in range(hg)]
        ctx = parts[0] if hg == 1 else jnp.concatenate(parts, axis=-1)
        o_ref[0] = ctx.astype(o_ref.dtype)      # one lane-dense full-width store


def _attention(q_arr, k_arr, v_arr, mask_i8, *, n_head, d_k, d_v, hg,
               q_off, k_off, v_off, B, Lq, Lk, return_attn, out_dtype,
               attn_dtype=jnp.float32, kv_tile=512):
    G = n_head // hg
    qw, vw = hg * d_k, hg * d_v
    # Flash KV tiling; a materialized probability output requires a single tile.
    Tk = Lk if return_attn else _pick_tile(Lk, kv_tile, 128)
    T = Lk // Tk
    mrows = mask_i8.shape[1]            # Lq (full mask) or 1 (key-padding mask)

    in_specs = [
        pl.BlockSpec((1, Lq, qw), lambda b, g, t: (b, 0, q_off + g)),
        pl.BlockSpec((1, Tk, qw), lambda b, g, t: (b, t, k_off + g)),
        pl.BlockSpec((1, Tk, vw), lambda b, g, t: (b, t, v_off + g)),
        pl.BlockSpec((1, mrows, Tk), lambda b, g, t: (b, 0, t)),
    ]
    out_specs = [pl.BlockSpec((1, Lq, vw), lambda b, g, t: (b, 0, g))]
    out_shape = [jax.ShapeDtypeStruct((B, Lq, n_head * d_v), out_dtype)]
    if return_attn:
        out_specs.append(
            pl.BlockSpec((hg, 1, Lq, Tk), lambda b, g, t: (g, b, 0, t)))
        out_shape.append(
            jax.ShapeDtypeStruct((n_head, B, Lq, Lk), attn_dtype))

    scratch = [pltpu.VMEM((hg, Lq, 1), jnp.float32),     # running max
               pltpu.VMEM((hg, Lq, 1), jnp.float32),     # running sum
               pltpu.VMEM((hg, Lq, d_v), jnp.float32)]   # context accumulator

    # Explicit VMEM budget: double-buffered blocks + (lane-padded) scratch.
    itm = jnp.dtype(q_arr.dtype).itemsize
    est = 2 * itm * (Lq * qw + Tk * qw + Tk * vw)
    est += 2 * mrows * Tk
    est += 2 * Lq * vw * jnp.dtype(out_dtype).itemsize
    if return_attn:
        est += 2 * hg * Lq * Tk * jnp.dtype(attn_dtype).itemsize
    est += 4 * hg * Lq * (2 * 128 + max(d_v, 128))
    vmem_limit = int(min(128 * 2**20, max(24 * 2**20, 2 * est)))

    kernel = functools.partial(_flash_attn_kernel, hg=hg, d_k=d_k, d_v=d_v,
                               out_probs=return_attn)
    res = pl.pallas_call(
        kernel,
        grid=(B, G, T),
        in_specs=in_specs,
        out_specs=out_specs,
        out_shape=out_shape,
        scratch_shapes=scratch,
        compiler_params=pltpu.CompilerParams(
            dimension_semantics=("parallel", "parallel", "arbitrary"),
            vmem_limit_bytes=vmem_limit),
    )(q_arr, k_arr, v_arr, mask_i8)

    if return_attn:
        ctx, attn = res
    else:
        (ctx,) = res
        attn = None
    return ctx, attn


# ---------------------------------------------------------------------------
# Parameter init (mirrors the torch __init__ statistics); 1/sqrt(d_k) is folded
# into the q-projection weights & bias so the attention kernel applies no scale.
# ---------------------------------------------------------------------------
def init_params(key, n_head, d_model, d_k, d_v, dtype=jnp.float32):
    ks = jax.random.split(key, 8)
    std_qk = (2.0 / (d_model + d_k)) ** 0.5
    std_v = (2.0 / (d_model + d_v)) ** 0.5
    std_fc = (2.0 / (n_head * d_v + d_model)) ** 0.5      # xavier_normal_
    b_in = 1.0 / (d_model ** 0.5)                         # torch Linear bias bound
    b_fc = 1.0 / ((n_head * d_v) ** 0.5)
    inv_temp = 1.0 / (float(d_k) ** 0.5)

    wq = (std_qk * jax.random.normal(ks[0], (d_model, n_head * d_k),
                                     jnp.float32) * inv_temp).astype(dtype)
    wk = (std_qk * jax.random.normal(ks[1], (d_model, n_head * d_k),
                                     jnp.float32)).astype(dtype)
    wv = (std_v * jax.random.normal(ks[2], (d_model, n_head * d_v),
                                    jnp.float32)).astype(dtype)
    bq = (jax.random.uniform(ks[3], (1, n_head * d_k), jnp.float32, -b_in, b_in)
          * inv_temp).astype(dtype)
    bk = jax.random.uniform(ks[4], (1, n_head * d_k), jnp.float32,
                            -b_in, b_in).astype(dtype)
    bv = jax.random.uniform(ks[5], (1, n_head * d_v), jnp.float32,
                            -b_in, b_in).astype(dtype)

    return {
        # separate projections (cross-attention path: no wrapper weight slicing)
        "w_q": wq, "b_q": bq, "w_k": wk, "b_k": bk, "w_v": wv, "b_v": bv,
        # fused [q|k|v] projection for the self-attention fast path
        "w_qkv": jnp.concatenate([wq, wk, wv], axis=1),
        "b_qkv": jnp.concatenate([bq, bk, bv], axis=1),
        "w_fc": (std_fc * jax.random.normal(ks[6], (n_head * d_v, d_model),
                                            jnp.float32)).astype(dtype),
        "b_fc": jax.random.uniform(ks[7], (1, d_model), jnp.float32,
                                   -b_fc, b_fc).astype(dtype),
        "ln_g": jnp.ones((1, d_model), dtype),
        "ln_b": jnp.zeros((1, d_model), dtype),
    }


# ---------------------------------------------------------------------------
# Forward pass
# ---------------------------------------------------------------------------
def multi_head_attention(params, q, k, v, mask=None, *, n_head, d_k, d_v,
                         return_attn=False, kv_tile=512,
                         attn_dtype=jnp.float32):
    """Eval-mode forward of the torch MultiHeadAttention module.

    q/k/v: (sz_b, len, d_model); mask: (sz_b, len_q, len_k) or (sz_b, 1, len_k),
    nonzero == masked.  Returns (output (sz_b, len_q, d_model),
    attn (n_head*sz_b, len_q, len_k) or None).
    """
    sz_b, len_q, d_model = q.shape
    len_k = k.shape[1]
    residual2d = q.reshape(sz_b * len_q, d_model)
    hk, hv = n_head * d_k, n_head * d_v

    # int8 mask (1 == masked), shared across heads; never an f32 bias in HBM.
    if mask is None:
        mask_i8 = jnp.zeros((sz_b, 1, len_k), jnp.int8)
    else:
        mask_i8 = (mask != 0).astype(jnp.int8)
        if mask_i8.ndim == 2:
            mask_i8 = mask_i8[:, None, :]

    fused_hg = _fused_head_group(n_head, d_k, d_v)
    self_attn = (q is k) and (k is v)

    if self_attn and fused_hg is not None:
        # Fused QKV GEMM (x read once); the (B, L, 2hk+hv) slab feeds the
        # attention kernel directly via three BlockSpecs (no HBM slicing).
        hg = fused_hg
        qkv = linear(q.reshape(sz_b * len_q, d_model),
                     params["w_qkv"], params["b_qkv"])
        qkv = qkv.reshape(sz_b, len_q, 2 * hk + hv)
        ctx, attn = _attention(
            qkv, qkv, qkv, mask_i8,
            n_head=n_head, d_k=d_k, d_v=d_v, hg=hg,
            q_off=0, k_off=hk // (hg * d_k), v_off=(2 * hk) // (hg * d_v),
            B=sz_b, Lq=len_q, Lk=len_q,
            return_attn=return_attn, out_dtype=q.dtype,
            attn_dtype=attn_dtype, kv_tile=kv_tile)
    else:
        # Cross-attention (or head widths too small for 128-lane slab routing):
        # separate projections with separately-stored weights.
        hg = _split_head_group(n_head, d_k, d_v)
        len_v = v.shape[1]
        q_p = linear(q.reshape(sz_b * len_q, d_model), params["w_q"],
                     params["b_q"]).reshape(sz_b, len_q, hk)
        k_p = linear(k.reshape(sz_b * len_k, d_model), params["w_k"],
                     params["b_k"]).reshape(sz_b, len_k, hk)
        v_p = linear(v.reshape(sz_b * len_v, d_model), params["w_v"],
                     params["b_v"]).reshape(sz_b, len_v, hv)
        ctx, attn = _attention(
            q_p, k_p, v_p, mask_i8,
            n_head=n_head, d_k=d_k, d_v=d_v, hg=hg,
            q_off=0, k_off=0, v_off=0,
            B=sz_b, Lq=len_q, Lk=len_k,
            return_attn=return_attn, out_dtype=q.dtype,
            attn_dtype=attn_dtype, kv_tile=kv_tile)

    # ctx is already (sz_b, len_q, n_head*d_v) head-concatenated; fc + residual
    # add + LayerNorm fused into one kernel (no intermediate HBM round trip).
    # TODO(synk): nn.Dropout (attn probs and fc output) is identity in eval mode.
    out = fc_add_layernorm(ctx.reshape(sz_b * len_q, hv),
                           params["w_fc"], params["b_fc"],
                           residual2d, params["ln_g"], params["ln_b"])
    out = out.reshape(sz_b, len_q, d_model)

    if attn is not None:
        # (n_head, sz_b, Lq, Lk) -> (n_head*sz_b, Lq, Lk): metadata-only reshape,
        # matches torch's head-major ordering.
        attn = attn.reshape(n_head * sz_b, len_q, len_k)
    return out, attn


# ---------------------------------------------------------------------------
if __name__ == "__main__":
    n_head, d_model, d_k, d_v = 2, 64, 64, 64
    sz_b, seq = 2, 16

    key = jax.random.PRNGKey(0)
    kp, kx, kz = jax.random.split(key, 3)
    params = init_params(kp, n_head, d_model, d_k, d_v)

    x = jax.random.normal(kx, (sz_b, seq, d_model), jnp.float32)
    # padding-style mask: True == masked; last two key positions are padding.
    mask = jnp.zeros((sz_b, seq, seq), jnp.bool_).at[:, :, seq - 2:].set(True)

    # 1) self-attention -> fused-slab path, with attention probabilities.
    out, attn = multi_head_attention(params, x, x, x, mask,
                                     n_head=n_head, d_k=d_k, d_v=d_v,
                                     return_attn=True)
    jax.block_until_ready((out, attn))
    assert out.shape == (sz_b, seq, d_model)
    assert attn.shape == (n_head * sz_b, seq, seq)
    assert bool(jnp.all(jnp.isfinite(out)))
    assert bool(jnp.allclose(jnp.sum(attn, axis=-1), 1.0, atol=1e-3))
    assert bool(jnp.all(attn[:, :, seq - 2:] < 1e-6))   # masked keys ~zero prob

    # 2) cross-attention signature (distinct arrays) -> split path, no probs;
    #    must reproduce the fused result.
    out2, attn2 = multi_head_attention(params, x, x + 0.0, x * 1.0, mask,
                                       n_head=n_head, d_k=d_k, d_v=d_v,
                                       return_attn=False)
    jax.block_until_ready(out2)
    assert attn2 is None
    assert bool(jnp.allclose(out, out2, atol=1e-3, rtol=1e-3))

    # 3) flash KV tiling check: longer sequence, (B, 1, Lk) key-padding mask;
    #    2-tile online softmax must match the single-tile result.
    seq3 = 256
    x3 = jax.random.normal(kz, (sz_b, seq3, d_model), jnp.float32)
    mask3 = jnp.zeros((sz_b, 1, seq3), jnp.bool_).at[:, :, 192:].set(True)
    out_a, _ = multi_head_attention(params, x3, x3, x3, mask3,
                                    n_head=n_head, d_k=d_k, d_v=d_v,
                                    return_attn=False, kv_tile=128)   # T = 2
    out_b, _ = multi_head_attention(params, x3, x3, x3, mask3,
                                    n_head=n_head, d_k=d_k, d_v=d_v,
                                    return_attn=False, kv_tile=256)   # T = 1
    jax.block_until_ready((out_a, out_b))
    assert bool(jnp.all(jnp.isfinite(out_a)))
    assert bool(jnp.allclose(out_a, out_b, atol=5e-3, rtol=5e-3))

    print("KERNEL_OK")
</pallas_src>

<mosaic_0001>
module attributes {stable_mosaic.version = 11 : i64} {
  func.func @_linear_kernel_1k(%arg0: i32, %arg1: i32, %arg2: memref<32x64xf32, #tpu.memory_space<vmem>>, %arg3: memref<64x384xf32, #tpu.memory_space<vmem>>, %arg4: memref<1x384xf32, #tpu.memory_space<vmem>>, %arg5: memref<32x384xf32, #tpu.memory_space<vmem>>) attributes {dimension_semantics = [#tpu.dimension_semantics<parallel>, #tpu.dimension_semantics<parallel>], iteration_bounds = array<i64: 1, 1>, scalar_prefetch = 0 : i64, scratch_operands = 0 : i64, tpu.core_type = #tpu.core_type<tc>, window_params = [{transform_indices = @transform_0, window_bounds = array<i64: 32, 64>}, {transform_indices = @transform_1, window_bounds = array<i64: 64, 384>}, {transform_indices = @transform_2, window_bounds = array<i64: 1, 384>}, {transform_indices = @transform_3, window_bounds = array<i64: 32, 384>}]} {
    %c0 = arith.constant 0 : index
    %c0_0 = arith.constant 0 : index
    %0 = vector.load %arg2[%c0, %c0_0] : memref<32x64xf32, #tpu.memory_space<vmem>>, vector<32x64xf32>
    %c0_1 = arith.constant 0 : index
    %c0_2 = arith.constant 0 : index
    %1 = vector.load %arg3[%c0_1, %c0_2] : memref<64x384xf32, #tpu.memory_space<vmem>>, vector<64x384xf32>
    %cst = arith.constant dense<0.000000e+00> : vector<32x384xf32>
    %2 = tpu.matmul %0, %1, %cst {dimension_numbers = #tpu.dot_dimension_numbers<[1], [0], [0], [1], [0, 0, 1, 1], [], []>} : vector<32x64xf32>, vector<64x384xf32>, vector<32x384xf32> -> vector<32x384xf32>
    %c0_3 = arith.constant 0 : index
    %c0_4 = arith.constant 0 : index
    %3 = vector.load %arg4[%c0_3, %c0_4] : memref<1x384xf32, #tpu.memory_space<vmem>>, vector<1x384xf32>
    %4 = vector.broadcast %3 : vector<1x384xf32> to vector<32x384xf32>
    %5 = arith.addf %2, %4 : vector<32x384xf32>
    %c0_5 = arith.constant 0 : index
    %c0_6 = arith.constant 0 : index
    %6 = vector.load %arg5[%c0_5, %c0_6] : memref<32x384xf32, #tpu.memory_space<vmem>>, vector<32x384xf32>
    tpu.vector_store %arg5[%c0_5, %c0_6], %5 {strides = array<i32>} : memref<32x384xf32, #tpu.memory_space<vmem>>, vector<32x384xf32>,
    return
  }
  func.func @transform_0(%arg0: i32, %arg1: i32) -> (i32, i32) {
    %c0_i32 = arith.constant 0 : i32
    %c0_i32_0 = arith.constant 0 : i32
    return %arg0, %c0_i32 : i32, i32
  }
  func.func @transform_1(%arg0: i32, %arg1: i32) -> (i32, i32) {
    %c0_i32 = arith.constant 0 : i32
    %c0_i32_0 = arith.constant 0 : i32
    return %c0_i32, %arg1 : i32, i32
  }
  func.func @transform_2(%arg0: i32, %arg1: i32) -> (i32, i32) {
    %c0_i32 = arith.constant 0 : i32
    %c0_i32_0 = arith.constant 0 : i32
    return %c0_i32, %arg1 : i32, i32
  }
  func.func @transform_3(%arg0: i32, %arg1: i32) -> (i32, i32) {
    %c0_i32 = arith.constant 0 : i32
    return %arg0, %arg1 : i32, i32
  }
}

</mosaic_0001>

<llo_original>
// kernel: tpu_custom_call.1
$region0: #{tpu_custom_call.1}
  #allocation0 [shape = 'u32[]', space=smem, size = 0x4, offset = 0x4, fixed_abs, tag = 'smem constant byte address 0x4 - core index']
  #allocation1 [shape = 'u32[144,128]{1,0:T(1,128)}', space=vmem, size = 0x12000, scoped, tag = 'internal scratch']
  %s0 = inlined_call_operand.hbm [shape: f32[32,64], index: 0, kind: input, shape index: {}]
  %s1 = inlined_call_operand.hbm [shape: f32[64,384], index: 1, kind: input, shape index: {}]
  %s2 = inlined_call_operand.vmem [shape: f32[1,384], index: 2, kind: input, shape index: {}]
  %s3 = inlined_call_operand.hbm [shape: f32[32,384], index: 3, kind: output, shape index: {}]
  %s4 = sld [smem:[#allocation0]]
  $region30: #{tpu_custom_call.1} parent=0
    _
  %s6 = ssub.s32 1, %s4
  %s7 = scalar_select 0, %s6, %s4
  $region1: #{tpu_custom_call.1} parent=0
    #allocation2 [shape = 'u8[16384]{0}', space=vmem, size = 0x4000, scoped, tag = 'input window, operand 0, single buffered']
    #allocation3 [shape = 's32[1]{0}', space=sflag, size = 0x4, scoped, tag = 'scoped memory for tpu_custom_call.1']
    #allocation4 [shape = 's32[1]{0}', space=sflag, size = 0x4, scoped, tag = 'scoped memory for tpu_custom_call.1']
    #allocation5 [shape = 'u8[98304]{0}', space=vmem, size = 0x18000, scoped, tag = 'input window, operand 1, single buffered']
    #allocation6 [shape = 's32[1]{0}', space=sflag, size = 0x4, scoped, tag = 'scoped memory for tpu_custom_call.1']
    #allocation7 [shape = 'u8[49152]{0}', space=vmem, size = 0xc000, scoped, tag = 'output window, operand 0, single buffered']
    %8 = vsyncpa [#allocation3], 0
    %9 = vsyncpa [#allocation6], 0
    %10 = vsyncpa [#allocation4], 0
    // Predicated region
    $region2: #{tpu_custom_call.1} parent=1 // pred_check
      _
    $region3: #{tpu_custom_call.1} parent=1 // pred_check_branch
      %12 = sbr.rel (0) target = $region5
    $region4: #{tpu_custom_call.1} parent=1 // pred_region
      %s14 = ssub.s32 512, 512
      %15 = vsyncadd [#allocation3], %s14
      %s16 = sshll.u32 [#allocation2], 4
      %s17 = int_to_ptr.vmem [resolvable:$true] %s16
      %22 = dma.hbm_to_vmem [thread:$0]  %s0, 512, %s17, [#allocation3], 128, 128, 8
    $region5: #{tpu_custom_call.1} parent=1 // pred_fallthru
      _
    // Predicated region
    $region6: #{tpu_custom_call.1} parent=1 // pred_check
      _
    $region7: #{tpu_custom_call.1} parent=1 // pred_check_branch
      %24 = sbr.rel (0) target = $region9
    $region8: #{tpu_custom_call.1} parent=1 // pred_region
      %s26 = ssub.s32 3072, 3072
      %27 = vsyncadd [#allocation6], %s26
      %s28 = sshll.u32 [#allocation5], 4
      %s29 = int_to_ptr.vmem [resolvable:$true] %s28
      %34 = dma.hbm_to_vmem [thread:$0]  %s1, 3072, %s29, [#allocation6], 384, 384, 24
    $region9: #{tpu_custom_call.1} parent=1 // pred_fallthru
      _
    // Predicated region
    $region10: #{tpu_custom_call.1} parent=1 // pred_check
      _
    $region11: #{tpu_custom_call.1} parent=1 // pred_check_branch
      %36 = sbr.rel (0) target = $region13
    $region12: #{tpu_custom_call.1} parent=1 // pred_region
      _
    $region13: #{tpu_custom_call.1} parent=1 // pred_fallthru
      _
    // Predicated region
    $region14: #{tpu_custom_call.1} parent=1 // pred_check
      _
    $region15: #{tpu_custom_call.1} parent=1 // pred_check_branch
      %38 = sbr.rel (0) target = $region17
    $region16: #{tpu_custom_call.1} parent=1 // pred_region
      %39 = dma.done [#allocation3], 512
    $region17: #{tpu_custom_call.1} parent=1 // pred_fallthru
      _
    // Predicated region
    $region18: #{tpu_custom_call.1} parent=1 // pred_check
      _
    $region19: #{tpu_custom_call.1} parent=1 // pred_check_branch
      %41 = sbr.rel (0) target = $region21
    $region20: #{tpu_custom_call.1} parent=1 // pred_region
      %42 = dma.done [#allocation6], 3072
    $region21: #{tpu_custom_call.1} parent=1 // pred_fallthru
      _
    %v43 = vld [vmem:[#allocation2] sm:$0xff]
    %v44 = vld [vmem:[#allocation2 + $0x8] sm:$0xff]
    %v45 = vld [vmem:[#allocation2 + $0x10] sm:$0xff]
    %v46 = vld [vmem:[#allocation2 + $0x18] sm:$0xff]
    %v47 = vld [vmem:[#allocation5] sm:$0xff]
    %v48 = vld [vmem:[#allocation5 + $0x8] sm:$0xff]
    %v49 = vld [vmem:[#allocation5 + $0x10] sm:$0xff]
    %v50 = vld [vmem:[#allocation5 + $0x18] sm:$0xff]
    %v51 = vld [vmem:[#allocation5 + $0x20] sm:$0xff]
    %v52 = vld [vmem:[#allocation5 + $0x28] sm:$0xff]
    %v53 = vld [vmem:[#allocation5 + $0x30] sm:$0xff]
    %v54 = vld [vmem:[#allocation5 + $0x38] sm:$0xff]
    %v55 = vld [vmem:[#allocation5 + $0x40] sm:$0xff]
    %v56 = vld [vmem:[#allocation5 + $0x48] sm:$0xff]
    %v57 = vld [vmem:[#allocation5 + $0x50] sm:$0xff]
    %v58 = vld [vmem:[#allocation5 + $0x58] sm:$0xff]
    %v59 = vld [vmem:[#allocation5 + $0x60] sm:$0xff]
    %v60 = vld [vmem:[#allocation5 + $0x68] sm:$0xff]
    %v61 = vld [vmem:[#allocation5 + $0x70] sm:$0xff]
    %v62 = vld [vmem:[#allocation5 + $0x78] sm:$0xff]
    %v63 = vld [vmem:[#allocation5 + $0x80] sm:$0xff]
    %v64 = vld [vmem:[#allocation5 + $0x88] sm:$0xff]
    %v65 = vld [vmem:[#allocation5 + $0x90] sm:$0xff]
    %v66 = vld [vmem:[#allocation5 + $0x98] sm:$0xff]
    %v67 = vld [vmem:[#allocation5 + $0xa0] sm:$0xff]
    %v68 = vld [vmem:[#allocation5 + $0xa8] sm:$0xff]
    %v69 = vld [vmem:[#allocation5 + $0xb0] sm:$0xff]
    %v70 = vld [vmem:[#allocation5 + $0xb8] sm:$0xff]
    %v71 = vld [vmem:[%s2] sm:$0x7]
    %v73 = vlaneseq
    %v74 = vshrl.u32 %v73, 7
    %v75 = vsub.s32 0, %v74
    %v76 = vrot.slane %v71, %v75
    %v77 = vlaneseq
    %v78 = vshrl.u32 %v77, 7
    %v79 = vsub.s32 1, %v78
    %v80 = vrot.slane %v71, %v79
    %v81 = vlaneseq
    %v82 = vshrl.u32 %v81, 7
    %v83 = vsub.s32 2, %v82
    %v84 = vrot.slane %v71, %v83
    %vm88 = vcmask 523264
    %v90 = vsel %vm88, %v43, 0
    %v93 = vsel %vm88, %v44, 0
    %v96 = vsel %vm88, %v45, 0
    %v99 = vsel %vm88, %v46, 0
    %101 = vmatprep.subr.mxu0 0.0
    %102 = vmatpush1.msra.mxu0 0.0
    %103 = vmatprep.subr.mxu0 0.0
    %104 = vmatpush1.msra.mxu0 0.0
    %105 = vmatprep.subr.mxu0 0.0
    %106 = vmatpush1.msra.mxu0 0.0
    %107 = vmatprep.subr.mxu0 0.0
    %108 = vmatpush1.msra.mxu0 0.0
    %109 = vmatprep.subr.mxu0 0.0
    %110 = vmatpush1.msra.mxu0 0.0
    %111 = vmatprep.subr.mxu0 0.0
    %112 = vmatpush1.msra.mxu0 0.0
    %113 = vmatprep.subr.mxu0 0.0
    %114 = vmatpush1.msra.mxu0 0.0
    %115 = vmatprep.subr.mxu0 0.0
    %116 = vmatpush1.msra.mxu0 0.0
    %117 = vmatprep.subr.mxu0 %v69
    %118 = vmatpush1.msra.mxu0 %v68
    %119 = vmatprep.subr.mxu0 %v66
    %120 = vmatpush1.msra.mxu0 %v65
    %121 = vmatprep.subr.mxu0 %v63
    %122 = vmatpush1.msra.mxu0 %v62
    %123 = vmatprep.subr.mxu0 %v60
    %124 = vmatpush1.msra.mxu0 %v59
    %125 = vmatprep.subr.mxu0 %v57
    %126 = vmatpush1.msra.mxu0 %v56
    %127 = vmatprep.subr.mxu0 %v54
    %128 = vmatpush1.msra.mxu0 %v53
    %129 = vmatprep.subr.mxu0 %v51
    %130 = vmatpush1.msra.mxu0 %v50
    %131 = vmatprep.subr.mxu0 %v48
    %132 = vmatpush1.msra.mxu0 %v47
    %133 = vmatprep.subr.mxu0 0.0
    %134 = vmatpush2.msra.mxu0 0.0
    %135 = vmatprep.subr.mxu0 0.0
    %136 = vmatpush2.msra.mxu0 0.0
    %137 = vmatprep.subr.mxu0 0.0
    %138 = vmatpush2.msra.mxu0 0.0
    %139 = vmatprep.subr.mxu0 0.0
    %140 = vmatpush2.msra.mxu0 0.0
    %141 = vmatprep.subr.mxu0 0.0
    %142 = vmatpush2.msra.mxu0 0.0
    %143 = vmatprep.subr.mxu0 0.0
    %144 = vmatpush2.msra.mxu0 0.0
    %145 = vmatprep.subr.mxu0 0.0
    %146 = vmatpush2.msra.mxu0 0.0
    %147 = vmatprep.subr.mxu0 0.0
    %148 = vmatpush2.msra.mxu0 0.0
    %149 = vmatprep.subr.mxu0 0.0
    %150 = vmatpush2.msra.mxu0 0.0
    %151 = vmatprep.subr.mxu0 0.0
    %152 = vmatpush2.msra.mxu0 0.0
    %153 = vmatprep.subr.mxu0 0.0
    %154 = vmatpush2.msra.mxu0 0.0
    %155 = vmatprep.subr.mxu0 0.0
    %156 = vmatpush2.msra.mxu0 0.0
    %157 = vmatprep.subr.mxu0 0.0
    %158 = vmatpush2.msra.mxu0 0.0
    %159 = vmatprep.subr.mxu0 0.0
    %160 = vmatpush2.msra.mxu0 0.0
    %161 = vmatprep.subr.mxu0 0.0
    %162 = vmatpush2.msra.mxu0 0.0
    %163 = vmatprep.subr.mxu0 0.0
    %164 = vmatpush2.msra.mxu0 0.0
    %165 = vmatprep.mubr.f32.mxu0 0.0
    %166 = vmatmul.mubr.f32.gmra.mxu0 %v90
    %v167 = vpop.f32.mrf.mxu0
    %v168 = vadd.f32 %v76, %v167
    %v169 = vpop.f32.mrf.mxu0
    %v170 = vadd.f32 %v80, %v169
    %171 = vmatprep.mubr.f32.mxu0 0.0
    %172 = vmatmul.mubr.f32.gmra.mxu0 %v93
    %v173 = vpop.f32.mrf.mxu0
    %v174 = vadd.f32 %v76, %v173
    %v175 = vpop.f32.mrf.mxu0
    %v176 = vadd.f32 %v80, %v175
    %177 = vmatprep.mubr.f32.mxu0 0.0
    %178 = vmatmul.mubr.f32.gmra.mxu0 %v96
    %v179 = vpop.f32.mrf.mxu0
    %v180 = vadd.f32 %v76, %v179
    %v181 = vpop.f32.mrf.mxu0
    %v182 = vadd.f32 %v80, %v181
    %183 = vmatprep.mubr.f32.mxu0 0.0
    %184 = vmatmul.mubr.f32.gmra.mxu0 %v99
    %v185 = vpop.f32.mrf.mxu0
    %v186 = vadd.f32 %v76, %v185
    %v187 = vpop.f32.mrf.mxu0
    %v188 = vadd.f32 %v80, %v187
    %189 = vdwg.mxu0
    %190 = vmatprep.subr.mxu0 0.0
    %191 = vmatpush1.msra.mxu0 0.0
    %192 = vmatprep.subr.mxu0 0.0
    %193 = vmatpush1.msra.mxu0 0.0
    %194 = vmatprep.subr.mxu0 0.0
    %195 = vmatpush1.msra.mxu0 0.0
    %196 = vmatprep.subr.mxu0 0.0
    %197 = vmatpush1.msra.mxu0 0.0
    %198 = vmatprep.subr.mxu0 0.0
    %199 = vmatpush1.msra.mxu0 0.0
    %200 = vmatprep.subr.mxu0 0.0
    %201 = vmatpush1.msra.mxu0 0.0
    %202 = vmatprep.subr.mxu0 0.0
    %203 = vmatpush1.msra.mxu0 0.0
    %204 = vmatprep.subr.mxu0 0.0
    %205 = vmatpush1.msra.mxu0 0.0
    %206 = vmatprep.subr.mxu0 0.0
    %207 = vmatpush1.msra.mxu0 %v70
    %208 = vmatprep.subr.mxu0 0.0
    %209 = vmatpush1.msra.mxu0 %v67
    %210 = vmatprep.subr.mxu0 0.0
    %211 = vmatpush1.msra.mxu0 %v64
    %212 = vmatprep.subr.mxu0 0.0
    %213 = vmatpush1.msra.mxu0 %v61
    %214 = vmatprep.subr.mxu0 0.0
    %215 = vmatpush1.msra.mxu0 %v58
    %216 = vmatprep.subr.mxu0 0.0
    %217 = vmatpush1.msra.mxu0 %v55
    %218 = vmatprep.subr.mxu0 0.0
    %219 = vmatpush1.msra.mxu0 %v52
    %220 = vmatprep.subr.mxu0 0.0
    %221 = vmatpush1.msra.mxu0 %v49
    %222 = vmatprep.subr.mxu0 0.0
    %223 = vmatpush2.msra.mxu0 0.0
    %224 = vmatprep.subr.mxu0 0.0
    %225 = vmatpush2.msra.mxu0 0.0
    %226 = vmatprep.subr.mxu0 0.0
    %227 = vmatpush2.msra.mxu0 0.0
    %228 = vmatprep.subr.mxu0 0.0
    %229 = vmatpush2.msra.mxu0 0.0
    %230 = vmatprep.subr.mxu0 0.0
    %231 = vmatpush2.msra.mxu0 0.0
    %232 = vmatprep.subr.mxu0 0.0
    %233 = vmatpush2.msra.mxu0 0.0
    %234 = vmatprep.subr.mxu0 0.0
    %235 = vmatpush2.msra.mxu0 0.0
    %236 = vmatprep.subr.mxu0 0.0
    %237 = vmatpush2.msra.mxu0 0.0
    %238 = vmatprep.subr.mxu0 0.0
    %239 = vmatpush2.msra.mxu0 0.0
    %240 = vmatprep.subr.mxu0 0.0
    %241 = vmatpush2.msra.mxu0 0.0
    %242 = vmatprep.subr.mxu0 0.0
    %243 = vmatpush2.msra.mxu0 0.0
    %244 = vmatprep.subr.mxu0 0.0
    %245 = vmatpush2.msra.mxu0 0.0
    %246 = vmatprep.subr.mxu0 0.0
    %247 = vmatpush2.msra.mxu0 0.0
    %248 = vmatprep.subr.mxu0 0.0
    %249 = vmatpush2.msra.mxu0 0.0
    %250 = vmatprep.subr.mxu0 0.0
    %251 = vmatpush2.msra.mxu0 0.0
    %252 = vmatprep.subr.mxu0 0.0
    %253 = vmatpush2.msra.mxu0 0.0
    %254 = vmatprep.mubr.f32.mxu0 0.0
    %255 = vmatmul.mubr.f32.gmra.mxu0 %v90
    %v256 = vpop.f32.mrf.mxu0
    %v257 = vadd.f32 %v84, %v256
    %v258 = vpop.f32.mrf.mxu0
    %259 = vmatprep.mubr.f32.mxu0 0.0
    %260 = vmatmul.mubr.f32.gmra.mxu0 %v93
    %v261 = vpop.f32.mrf.mxu0
    %v262 = vadd.f32 %v84, %v261
    %v263 = vpop.f32.mrf.mxu0
    %264 = vmatprep.mubr.f32.mxu0 0.0
    %265 = vmatmul.mubr.f32.gmra.mxu0 %v96
    %v266 = vpop.f32.mrf.mxu0
    %v267 = vadd.f32 %v84, %v266
    %v268 = vpop.f32.mrf.mxu0
    %269 = vmatprep.mubr.f32.mxu0 0.0
    %270 = vmatmul.mubr.f32.gmra.mxu0 %v99
    %v271 = vpop.f32.mrf.mxu0
    %v272 = vadd.f32 %v84, %v271
    %v273 = vpop.f32.mrf.mxu0
    %274 = vdwg.mxu0
    %275 = vst [vmem:[#allocation7] sm:$0xff] %v168
    %276 = vst [vmem:[#allocation7 + $0x8] sm:$0xff] %v170
    %277 = vst [vmem:[#allocation7 + $0x10] sm:$0xff] %v257
    %278 = vst [vmem:[#allocation7 + $0x18] sm:$0xff] %v174
    %279 = vst [vmem:[#allocation7 + $0x20] sm:$0xff] %v176
    %280 = vst [vmem:[#allocation7 + $0x28] sm:$0xff] %v262
    %281 = vst [vmem:[#allocation7 + $0x30] sm:$0xff] %v180
    %282 = vst [vmem:[#allocation7 + $0x38] sm:$0xff] %v182
    %283 = vst [vmem:[#allocation7 + $0x40] sm:$0xff] %v267
    %284 = vst [vmem:[#allocation7 + $0x48] sm:$0xff] %v186
    %285 = vst [vmem:[#allocation7 + $0x50] sm:$0xff] %v188
    %286 = vst [vmem:[#allocation7 + $0x58] sm:$0xff] %v272
    // Predicated region
    $region22: #{tpu_custom_call.1} parent=1 // pred_check
      _
    $region23: #{tpu_custom_call.1} parent=1 // pred_check_branch
      %288 = sbr.rel (0) target = $region25
    $region24: #{tpu_custom_call.1} parent=1 // pred_region
      %s290 = ssub.s32 1536, 1536
      %291 = vsyncadd [#allocation4], %s290
      %s292 = sshll.u32 [#allocation7], 4
      %s293 = int_to_ptr.vmem [resolvable:$true] %s292
      %298 = dma.vmem_to_hbm [thread:$0]  %s293, 1536, %s3, [#allocation4], 384, 384, 24
    $region25: #{tpu_custom_call.1} parent=1 // pred_fallthru
      _
    // Predicated region
    $region26: #{tpu_custom_call.1} parent=1 // pred_check
      _
    $region27: #{tpu_custom_call.1} parent=1 // pred_check_branch
      %300 = sbr.rel (0) target = $region29
    $region28: #{tpu_custom_call.1} parent=1 // pred_region
      %301 = dma.done [#allocation4], 1536
    $region29: #{tpu_custom_call.1} parent=1 // pred_fallthru
      _
    %302 = vsyncpa [#allocation3], 1
    %303 = vsyncpa [#allocation6], 1
    %304 = vsyncpa [#allocation4], 1

</llo_original>
